<compile_context>
chip_gen: v7x
topology: tpu7x:2x2x1
jax: 0.10.0
libtpu: 0.0.40
codegen_flags: <defaults>
</compile_context>

<pallas_src>
import functools

import jax
import jax.numpy as jnp
from jax.experimental import pallas as pl
from jax.experimental.pallas import tpu as pltpu

DROPOUT_RATE = 0.2
_SUBLANE = 8
_MIB = 1024 * 1024


def _round_up(x, m):
    return (x + m - 1) // m * m


def _cdiv(a, b):
    return (a + b - 1) // b


def _tpu_config():
    """Generation-aware padding / tiling / VMEM-limit choices."""
    vmem = None
    try:
        vmem = int(pltpu.get_tpu_info().vmem_capacity_bytes)
    except Exception:
        vmem = None
    kind = ""
    try:
        kind = jax.devices()[0].device_kind.lower()
    except Exception:
        pass
    if vmem is None:
        # Unknown (e.g. interpret mode): assume the tightest budget (v7x, 64 MiB/TC).
        vmem = 128 * _MIB if ("v5" in kind or "v6" in kind) else 64 * _MIB
    lane_pad = 128 if "v5" in kind else 256       # MXU 128x128 (v5) vs 256x256 (v6e/v7x)
    big_vmem = vmem >= 100 * _MIB
    tm_cap = 512 if big_vmem else 256
    d_chunk_cap = 2048 if big_vmem else 1024
    vmem_limit = min(100 * _MIB, max(32 * _MIB, vmem - 16 * _MIB))
    return lane_pad, tm_cap, d_chunk_cap, vmem_limit


def prepare_params(w1, b1, w2, b2):
    """Pad / cast the FFN parameters once (avoids per-call HBM padding passes)."""
    lane_pad, _, d_chunk_cap, _ = _tpu_config()
    H, D = w1.shape
    Hp = _round_up(H, lane_pad)
    Dp0 = _round_up(D, lane_pad)
    # Few, wide, lane-aligned chunks; Dp is padded up to n_chunks * d_chunk so the
    # chunk width never collapses to 128 for awkward D.
    n_chunks = _cdiv(Dp0, d_chunk_cap)
    d_chunk = _round_up(_cdiv(Dp0, n_chunks), lane_pad)
    Dp = n_chunks * d_chunk
    w1p = jnp.zeros((Hp, Dp), jnp.bfloat16).at[:H, :D].set(w1.astype(jnp.bfloat16))
    b1p = jnp.zeros((1, Dp), jnp.float32).at[:, :D].set(
        jnp.reshape(b1, (1, D)).astype(jnp.float32))
    w2p = jnp.zeros((Dp, Hp), jnp.bfloat16).at[:D, :H].set(w2.astype(jnp.bfloat16))
    b2p = jnp.zeros((1, Hp), jnp.float32).at[:, :H].set(
        jnp.reshape(b2, (1, H)).astype(jnp.float32))
    return dict(w1p=w1p, b1p=b1p, w2p=w2p, b2p=b2p,
                H=H, D=D, Hp=Hp, Dp=Dp, d_chunk=d_chunk)


def _fmix32(x):
    """murmur3-style 32-bit finalizer (strong avalanche, plain VPU ops)."""
    x ^= x >> 16
    x *= jnp.uint32(0x7FEB352D)
    x ^= x >> 15
    x *= jnp.uint32(0x846CA68B)
    x ^= x >> 16
    return x


def _ffn_kernel(seed_ref, x_ref, w1_ref, b1_ref, w2_ref, b2_ref, o_ref, acc_ref,
                *, training: bool, d_chunk: int):
    x = x_ref[...]                                  # (tm, Hp) bf16 (cast in wrapper)
    n_chunks = w1_ref.shape[1] // d_chunk

    # f32 accumulator in VMEM scratch, seeded with the output bias.
    acc_ref[...] = jnp.broadcast_to(b2_ref[...], acc_ref.shape)

    # Stream the 4H hidden dim in wide chunks (single dot when VMEM allows).
    for c in range(n_chunks):
        lo = c * d_chunk
        h = jnp.dot(x, w1_ref[:, lo:lo + d_chunk],
                    preferred_element_type=jnp.float32)           # (tm, d_chunk) f32
        h = jnp.maximum(h + b1_ref[:, lo:lo + d_chunk], 0.0)      # bias + ReLU in f32
        acc_ref[...] += jnp.dot(h.astype(jnp.bfloat16), w2_ref[lo:lo + d_chunk, :],
                                preferred_element_type=jnp.float32)

    y = acc_ref[...]
    if training:
        # Counter-based hash PRNG: global element coordinates mixed with the seed via
        # multiplicative hashes + a murmur finalizer.  Grid-invariant, decorrelated
        # across tiles/seeds, and needs no TPU-specific PRNG primitive.
        # TODO(synk): RNG stream differs from torch's dropout sampler (same keep
        # probability and 1/(1-p) scaling, different bits).
        tm, tn = o_ref.shape
        row = (jax.lax.broadcasted_iota(jnp.int32, (tm, tn), 0)
               + pl.program_id(0) * tm).astype(jnp.uint32)
        col = (jax.lax.broadcasted_iota(jnp.int32, (tm, tn), 1)
               + pl.program_id(1) * tn).astype(jnp.uint32)
        seed = seed_ref[0].astype(jnp.uint32)
        bits = _fmix32((row * jnp.uint32(0x9E3779B1))
                       ^ (col * jnp.uint32(0x85EBCA6B))
                       ^ (seed * jnp.uint32(0xC2B2AE35)))
        keep = (bits >> 8).astype(jnp.int32) >= jnp.int32(int(DROPOUT_RATE * (1 << 24)))
        y = jnp.where(keep, y * (1.0 / (1.0 - DROPOUT_RATE)), 0.0)

    o_ref[...] = y.astype(o_ref.dtype)


def feed_forward(x, params, *, training: bool = False, seed: int = 0):
    """x: (B, T, H) float; params: output of prepare_params()."""
    B, T, H = x.shape
    assert H == params["H"], "x hidden dim does not match params"
    Hp, Dp, d_chunk = params["Hp"], params["Dp"], params["d_chunk"]
    M = B * T

    _, tm_cap, _, vmem_limit = _tpu_config()
    budget = int(vmem_limit * 0.85)

    # Largest row tile (multiple of 8) that keeps the per-step VMEM footprint in budget.
    weight_bytes = 2 * Hp * Dp * 2 + (Hp + Dp) * 4   # single-buffered bf16 W1/W2 + f32 biases

    def _usage(tm):
        return (weight_bytes
                + 2 * tm * Hp * 2          # x tile, double-buffered, bf16
                + 2 * tm * Hp * 4          # out tile, double-buffered, f32
                + tm * Hp * 4              # f32 accumulator scratch
                + tm * d_chunk * 6         # h (f32) + h (bf16)
                + tm * Hp * 8)             # dropout mask / iota temporaries headroom

    tm = min(tm_cap, _round_up(M, _SUBLANE))
    while tm > _SUBLANE and _usage(tm) > budget:
        tm = _round_up(max(tm // 2, _SUBLANE), _SUBLANE)

    Mp = _round_up(M, tm)
    grid_m = Mp // tm

    # Single row-tile: split output columns across a second "parallel" grid axis so
    # both TensorCores of a v7x chip get work (harmless on single-TC chips).
    tn = Hp // 2 if (grid_m == 1 and Hp % 256 == 0) else Hp
    grid_n = Hp // tn

    # x: cast to bf16 (what the MXU consumes) and pad only if needed.
    xb = x.reshape(M, H).astype(jnp.bfloat16)
    if Mp == M and Hp == H:
        x2d = xb
    else:
        x2d = jnp.zeros((Mp, Hp), jnp.bfloat16).at[:M, :H].set(xb)

    seed_arr = jnp.asarray([seed], dtype=jnp.int32)
    w1p, b1p, w2p, b2p = params["w1p"], params["b1p"], params["w2p"], params["b2p"]

    const = pl.Buffered(1)                 # block index constant -> no double buffer
    w2_mode = const if grid_n == 1 else None

    flops = 4 * Mp * Hp * Dp
    bytes_accessed = (x2d.size * 2 + w1p.size * 2 + w2p.size * 2
                      + b1p.size * 4 + b2p.size * 4 + Mp * Hp * 4)

    out2d = pl.pallas_call(
        functools.partial(_ffn_kernel, training=training, d_chunk=d_chunk),
        out_shape=jax.ShapeDtypeStruct((Mp, Hp), jnp.float32),
        grid_spec=pltpu.PrefetchScalarGridSpec(
            num_scalar_prefetch=1,                                    # seed -> SMEM
            grid=(grid_m, grid_n),
            in_specs=[
                pl.BlockSpec((tm, Hp), lambda i, j, s: (i, 0)),       # x tile (pipelined)
                pl.BlockSpec((Hp, Dp), lambda i, j, s: (0, 0),
                             pipeline_mode=const),                    # W1 (VMEM-resident)
                pl.BlockSpec((1, Dp), lambda i, j, s: (0, 0),
                             pipeline_mode=const),                    # b1
                pl.BlockSpec((Dp, tn), lambda i, j, s: (0, j),
                             pipeline_mode=w2_mode),                  # W2 (col tile)
                pl.BlockSpec((1, tn), lambda i, j, s: (0, j),
                             pipeline_mode=w2_mode),                  # b2
            ],
            out_specs=pl.BlockSpec((tm, tn), lambda i, j, s: (i, j)),
            scratch_shapes=[pltpu.VMEM((tm, tn), jnp.float32)],       # f32 accumulator
        ),
        compiler_params=pltpu.CompilerParams(
            dimension_semantics=("parallel", "parallel"),
            vmem_limit_bytes=vmem_limit,
        ),
        cost_estimate=pl.CostEstimate(
            flops=flops, transcendentals=0, bytes_accessed=bytes_accessed),
    )(seed_arr, x2d, w1p, b1p, w2p, b2p)

    return out2d[:M, :H].reshape(B, T, H).astype(x.dtype)


def init_params(key, hidden_dim: int, inflation_factor: int = 4):
    """Deterministic PyTorch-Linear-style init (uniform +/- 1/sqrt(fan_in))."""
    D = hidden_dim * inflation_factor
    k1, k2, k3, k4 = jax.random.split(key, 4)
    bound1 = 1.0 / jnp.sqrt(hidden_dim)
    bound2 = 1.0 / jnp.sqrt(D)
    w1 = jax.random.uniform(k1, (hidden_dim, D), jnp.float32, -bound1, bound1)
    b1 = jax.random.uniform(k2, (1, D), jnp.float32, -bound1, bound1)
    w2 = jax.random.uniform(k3, (D, hidden_dim), jnp.float32, -bound2, bound2)
    b2 = jax.random.uniform(k4, (1, hidden_dim), jnp.float32, -bound2, bound2)
    return w1, b1, w2, b2


if __name__ == "__main__":
    B, T, H = 2, 8, 32               # batch, seq, hidden_dim (inflation 4 -> D = 128)
    key = jax.random.PRNGKey(0)
    kx, kp = jax.random.split(key)
    x = jax.random.normal(kx, (B, T, H), dtype=jnp.float32)
    w1, b1, w2, b2 = init_params(kp, H, inflation_factor=4)
    params = prepare_params(w1, b1, w2, b2)      # pad / cast weights once

    # Eval mode (dropout = identity), matching model.eval().
    out = jax.block_until_ready(feed_forward(x, params, training=False))

    # Reference mirroring the kernel's bf16 MXU inputs / f32 accumulation.
    xf = x.reshape(-1, H).astype(jnp.bfloat16)
    h_ref = jnp.maximum(
        jnp.dot(xf, w1.astype(jnp.bfloat16), preferred_element_type=jnp.float32) + b1, 0.0)
    y_ref = jnp.dot(h_ref.astype(jnp.bfloat16), w2.astype(jnp.bfloat16),
                    preferred_element_type=jnp.float32) + b2
    ref_bf16 = y_ref.reshape(B, T, H)
    assert jnp.allclose(out, ref_bf16, atol=1e-4, rtol=1e-4)

    # Loose check against the full-f32 reference (bf16 rounding bound).
    ref_f32 = (jnp.maximum(x.reshape(-1, H) @ w1 + b1, 0.0) @ w2 + b2).reshape(B, T, H)
    assert jnp.allclose(out, ref_f32, atol=5e-2, rtol=5e-2)

    # Training mode: exercise the dropout path, check rate and 1/(1-p) scaling.
    out_tr = jax.block_until_ready(feed_forward(x, params, training=True, seed=123))
    assert out_tr.shape == (B, T, H)
    assert bool(jnp.all(jnp.isfinite(out_tr)))
    drop_frac = float(jnp.mean(out_tr == 0.0))
    assert 0.05 < drop_frac < 0.4, drop_frac
    scaled = out * (1.0 / (1.0 - DROPOUT_RATE))
    kept = out_tr != 0.0
    assert jnp.allclose(jnp.where(kept, out_tr, scaled), scaled, atol=1e-4, rtol=1e-4)

    print("KERNEL_OK")
</pallas_src>

<mosaic_0001>
module attributes {stable_mosaic.version = 11 : i64} {
  func.func @_ffn_kernel(%arg0: i32, %arg1: i32, %arg2: memref<1xi32, #tpu.memory_space<smem>>, %arg3: memref<16x256xbf16, #tpu.memory_space<vmem>>, %arg4: memref<256x256xbf16, #tpu.memory_space<vmem>>, %arg5: memref<1x256xf32, #tpu.memory_space<vmem>>, %arg6: memref<256x128xbf16, #tpu.memory_space<vmem>>, %arg7: memref<1x128xf32, #tpu.memory_space<vmem>>, %arg8: memref<16x128xf32, #tpu.memory_space<vmem>>, %arg9: memref<16x128xf32, #tpu.memory_space<vmem>>) attributes {dimension_semantics = [#tpu.dimension_semantics<parallel>, #tpu.dimension_semantics<parallel>], iteration_bounds = array<i64: 1, 2>, scalar_prefetch = 1 : i64, scratch_operands = 1 : i64, tpu.core_type = #tpu.core_type<tc>, window_params = [{transform_indices = @transform_0, window_bounds = array<i64: 16, 256>}, {pipeline_mode = #tpu.pipeline_mode<synchronous>, transform_indices = @transform_1, window_bounds = array<i64: 256, 256>}, {pipeline_mode = #tpu.pipeline_mode<synchronous>, transform_indices = @transform_2, window_bounds = array<i64: 1, 256>}, {transform_indices = @transform_3, window_bounds = array<i64: 256, 128>}, {transform_indices = @transform_4, window_bounds = array<i64: 1, 128>}, {transform_indices = @transform_5, window_bounds = array<i64: 16, 128>}]} {
    %c0 = arith.constant 0 : index
    %c0_0 = arith.constant 0 : index
    %0 = vector.load %arg3[%c0, %c0_0] : memref<16x256xbf16, #tpu.memory_space<vmem>>, vector<16x256xbf16>
    %c0_1 = arith.constant 0 : index
    %c0_2 = arith.constant 0 : index
    %1 = vector.load %arg7[%c0_1, %c0_2] : memref<1x128xf32, #tpu.memory_space<vmem>>, vector<1x128xf32>
    %2 = vector.shape_cast %1 : vector<1x128xf32> to vector<1x128xf32>
    %3 = vector.broadcast %2 : vector<1x128xf32> to vector<16x128xf32>
    %c0_3 = arith.constant 0 : index
    %c0_4 = arith.constant 0 : index
    %4 = vector.load %arg9[%c0_3, %c0_4] : memref<16x128xf32, #tpu.memory_space<vmem>>, vector<16x128xf32>
    tpu.vector_store %arg9[%c0_3, %c0_4], %3 {strides = array<i32>} : memref<16x128xf32, #tpu.memory_space<vmem>>, vector<16x128xf32>,
    %c0_5 = arith.constant 0 : index
    %c0_6 = arith.constant 0 : index
    %5 = vector.load %arg4[%c0_5, %c0_6] : memref<256x256xbf16, #tpu.memory_space<vmem>>, vector<256x256xbf16>
    %cst = arith.constant dense<0.000000e+00> : vector<16x256xf32>
    %6 = tpu.matmul %0, %5, %cst {dimension_numbers = #tpu.dot_dimension_numbers<[1], [0], [0], [1], [0, 0, 1, 1], [], []>} : vector<16x256xbf16>, vector<256x256xbf16>, vector<16x256xf32> -> vector<16x256xf32>
    %c0_7 = arith.constant 0 : index
    %c0_8 = arith.constant 0 : index
    %7 = vector.load %arg5[%c0_7, %c0_8] : memref<1x256xf32, #tpu.memory_space<vmem>>, vector<1x256xf32>
    %8 = vector.broadcast %7 : vector<1x256xf32> to vector<16x256xf32>
    %9 = arith.addf %6, %8 : vector<16x256xf32>
    %cst_9 = arith.constant 0.000000e+00 : f32
    %10 = vector.broadcast %cst_9 : f32 to vector<16x256xf32>
    %11 = arith.maximumf %9, %10 : vector<16x256xf32>
    %c0_10 = arith.constant 0 : index
    %c0_11 = arith.constant 0 : index
    %12 = vector.load %arg9[%c0_10, %c0_11] : memref<16x128xf32, #tpu.memory_space<vmem>>, vector<16x128xf32>
    %13 = arith.truncf %11 : vector<16x256xf32> to vector<16x256xbf16>
    %c0_12 = arith.constant 0 : index
    %c0_13 = arith.constant 0 : index
    %14 = vector.load %arg6[%c0_12, %c0_13] : memref<256x128xbf16, #tpu.memory_space<vmem>>, vector<256x128xbf16>
    %cst_14 = arith.constant dense<0.000000e+00> : vector<16x128xf32>
    %15 = tpu.matmul %13, %14, %cst_14 {dimension_numbers = #tpu.dot_dimension_numbers<[1], [0], [0], [1], [0, 0, 1, 1], [], []>} : vector<16x256xbf16>, vector<256x128xbf16>, vector<16x128xf32> -> vector<16x128xf32>
    %16 = arith.addf %12, %15 : vector<16x128xf32>
    %c0_15 = arith.constant 0 : index
    %c0_16 = arith.constant 0 : index
    %17 = vector.load %arg9[%c0_15, %c0_16] : memref<16x128xf32, #tpu.memory_space<vmem>>, vector<16x128xf32>
    tpu.vector_store %arg9[%c0_15, %c0_16], %16 {strides = array<i32>} : memref<16x128xf32, #tpu.memory_space<vmem>>, vector<16x128xf32>,
    %c0_17 = arith.constant 0 : index
    %c0_18 = arith.constant 0 : index
    %18 = vector.load %arg9[%c0_17, %c0_18] : memref<16x128xf32, #tpu.memory_space<vmem>>, vector<16x128xf32>
    %c0_19 = arith.constant 0 : index
    %c0_20 = arith.constant 0 : index
    %19 = vector.load %arg8[%c0_19, %c0_20] : memref<16x128xf32, #tpu.memory_space<vmem>>, vector<16x128xf32>
    tpu.vector_store %arg8[%c0_19, %c0_20], %18 {strides = array<i32>} : memref<16x128xf32, #tpu.memory_space<vmem>>, vector<16x128xf32>,
    return
  }
  func.func @transform_0(%arg0: i32, %arg1: i32, %arg2: memref<1xi32, #tpu.memory_space<smem>>) -> (i32, i32) {
    %c0_i32 = arith.constant 0 : i32
    %c0_i32_0 = arith.constant 0 : i32
    return %arg0, %c0_i32 : i32, i32
  }
  func.func @transform_1(%arg0: i32, %arg1: i32, %arg2: memref<1xi32, #tpu.memory_space<smem>>) -> (i32, i32) {
    %c0_i32 = arith.constant 0 : i32
    %c0_i32_0 = arith.constant 0 : i32
    %c0_i32_1 = arith.constant 0 : i32
    return %c0_i32, %c0_i32_0 : i32, i32
  }
  func.func @transform_2(%arg0: i32, %arg1: i32, %arg2: memref<1xi32, #tpu.memory_space<smem>>) -> (i32, i32) {
    %c0_i32 = arith.constant 0 : i32
    %c0_i32_0 = arith.constant 0 : i32
    %c0_i32_1 = arith.constant 0 : i32
    return %c0_i32, %c0_i32_0 : i32, i32
  }
  func.func @transform_3(%arg0: i32, %arg1: i32, %arg2: memref<1xi32, #tpu.memory_space<smem>>) -> (i32, i32) {
    %c0_i32 = arith.constant 0 : i32
    %c0_i32_0 = arith.constant 0 : i32
    return %c0_i32, %arg1 : i32, i32
  }
  func.func @transform_4(%arg0: i32, %arg1: i32, %arg2: memref<1xi32, #tpu.memory_space<smem>>) -> (i32, i32) {
    %c0_i32 = arith.constant 0 : i32
    %c0_i32_0 = arith.constant 0 : i32
    return %c0_i32, %arg1 : i32, i32
  }
  func.func @transform_5(%arg0: i32, %arg1: i32, %arg2: memref<1xi32, #tpu.memory_space<smem>>) -> (i32, i32) {
    %c0_i32 = arith.constant 0 : i32
    return %arg0, %arg1 : i32, i32
  }
}

</mosaic_0001>

<llo_original>
// kernel: tpu_custom_call.1
$region0: #{tpu_custom_call.1}
  #allocation0 [shape = 'u32[]', space=smem, size = 0x4, offset = 0x4, fixed_abs, tag = 'smem constant byte address 0x4 - core index']
  #allocation1 [shape = 'u32[144,128]{1,0:T(1,128)}', space=vmem, size = 0x12000, scoped, tag = 'internal scratch']
  #allocation2 [shape = 'f32[16,128]{1,0:T(8,128)}', space=vmem, size = 0x2000, scoped, tag = 'scratch operand']
  #allocation3 [shape = 's32[1]{0}', space=sflag, size = 0x4, scoped, tag = 'scoped memory for tpu_custom_call.1']
  #allocation4 [shape = 's32[1]{0:T(128)S(6)}', space=smem, size = 0x200, scoped, tag = 'prefetched SMEM operand 0']
  %s0 = inlined_call_operand.<no memory space> [shape: s32[1], index: 0, kind: input, shape index: {}]
  %s1 = inlined_call_operand.hbm [shape: bf16[16,256], index: 1, kind: input, shape index: {}]
  %s2 = inlined_call_operand.hbm [shape: bf16[256,256], index: 2, kind: input, shape index: {}]
  %s3 = inlined_call_operand.vmem [shape: f32[1,256], index: 3, kind: input, shape index: {}]
  %s4 = inlined_call_operand.hbm [shape: bf16[256,256], index: 4, kind: input, shape index: {}]
  %s5 = inlined_call_operand.vmem [shape: f32[1,256], index: 5, kind: input, shape index: {}]
  %s6 = inlined_call_operand.hbm [shape: f32[16,256], index: 6, kind: output, shape index: {}]
  %s7 = sld [smem:[#allocation0]]
  $region65: #{tpu_custom_call.1} parent=0
    _
  %s9 = ssub.s32 1, %s7
  %s10 = scalar_select 0, %s9, %s7
  %11 = sst [smem:[#allocation4]] %s0
  $region1: #{tpu_custom_call.1} parent=0
    #allocation5 [shape = 'u8[8192]{0}', space=vmem, size = 0x2000, scoped, tag = 'input window, operand 1, single buffered']
    #allocation6 [shape = 's32[2]{0}', space=sflag, size = 0x8, scoped, tag = 'scoped memory for tpu_custom_call.1']
    #allocation7 [shape = 's32[2]{0}', space=sflag, size = 0x8, scoped, tag = 'scoped memory for tpu_custom_call.1']
    #allocation8 [shape = 'u8[131072]{0}', space=vmem, size = 0x20000, scoped, tag = 'input window, operand 2, single buffered']
    #allocation9 [shape = 's32[1]{0}', space=sflag, size = 0x4, scoped, tag = 'scoped memory for tpu_custom_call.1']
    #allocation10 [shape = 'u8[131072]{0}', space=vmem, size = 0x20000, scoped, tag = 'input window, operand 4']
    #allocation11 [shape = 'u8[16384]{0}', space=vmem, size = 0x4000, scoped, tag = 'output window, operand 0']
    %12 = vsyncpa [#allocation6], 0
    %13 = vsyncpa [#allocation9], 0
    %14 = vsyncpa [#allocation7], 0
    %s15 = scalar_lea.sflag [#allocation7], 1
    %16 = vsyncpa %s15, 0
    loop: start=0, step=1, limit=4
    $region2: #{tpu_custom_call.1} parent=1 // loop_pre_header
      _
    $region3: #{tpu_custom_call.1} parent=1 // loop_header
      %s18 = sphi 0, %s22
      %p19 = scmp.ge.s32.totalorder %s18, 4
      %s25 = sphi 0, %s37
      %s26 = sphi 0, %s33
      %s27 = sphi 0, %s25
      %s28 = sphi 0, %s26
      %s29 = sphi 0, %s27
      %s30 = sphi 0, %s28
      %s40 = sphi 0, %s42
      %s43 = sphi 0, %s40
      %s44 = sphi 0, %s43
      %s60 = sphi 0, %s44
      %s64 = sphi 0, %s64
      %s66 = sphi 0, %s64
      %s67 = sphi 0, %s66
      %s81 = sphi 0, %s67
      %s85 = sphi 0, %s85
      %s87 = sphi 0, %s85
      %s88 = sphi 0, %s87
      %s102 = sphi 0, %s88
      %s108 = sphi 0, %s110
      %s111 = sphi 0, %s108
      %s112 = sphi 0, %s111
      %s128 = sphi 0, %s112
      %s134 = sphi 0, %s136
      %s137 = sphi 0, %s134
      %s138 = sphi 0, %s137
      %s154 = sphi 0, %s138
      %s162 = sphi 0, %s164
      %s165 = sphi 0, %s162
      %s166 = sphi 0, %s165
      %s182 = sphi 0, %s166
    $region4: #{tpu_custom_call.1} parent=1 // loop_header_branch
      %21 = sbr.rel (%p19) target = $region8
    $region5: #{tpu_custom_call.1} parent=1 // loop_body
      %s23 = ssub.s32 %s18, 1
      %s24 = ssub.s32 %s18, 2
      %s31 = sadd.s32 1, %s26
      %p32 = scmp.ge.s32.totalorder %s31, 2
      %s33 = scalar_select %p32, 0, %s31
      %s34 = sadd.s32 1, %s25
      %s35 = scalar_select %p32, %s34, %s25
      %p36 = scmp.ge.s32.totalorder %s35, 1
      %s37 = scalar_select %p36, 0, %s35
      %s38 = ssub.s32 %s25, %s37
      %p39 = scmp.eq.s32.totalorder %s38, 0
      %s41 = sadd.s32 %s40, 1
      %s42 = scalar_select %p39, %s40, %s41
      %p45 = pneg %p39
      %p46 = scmp.eq.s32.totalorder %s18, 1
      %p47 = por %p45, %p46
      %p48 = scmp.ne.s32.totalorder %s40, %s43
      %p49 = scmp.eq.s32.totalorder %s18, 0
      %p50 = por %p48, %p49
      %p51 = scmp.ne.s32.totalorder %s40, %s43
      %p52 = scmp.eq.s32.totalorder %s23, 1
      %p53 = por %p51, %p52
      %p54 = scmp.ne.s32.totalorder %s43, %s44
      %p55 = scmp.eq.s32.totalorder %s23, 0
      %p56 = por %p54, %p55
      %p57 = scmp.ne.s32.totalorder %s43, %s44
      %p58 = scmp.eq.s32.totalorder %s24, 1
      %p59 = por %p57, %p58
      %p61 = scmp.ne.s32.totalorder %s44, %s60
      %p62 = scmp.eq.s32.totalorder %s24, 0
      %p63 = por %p61, %p62
      %s65 = sadd.s32 %s64, 1
      %p68 = scmp.eq.s32.totalorder %s18, 1
      %p69 = scmp.ne.s32.totalorder %s64, %s66
      %p70 = scmp.eq.s32.totalorder %s18, 0
      %p71 = por %p69, %p70
      %p72 = scmp.ne.s32.totalorder %s64, %s66
      %p73 = scmp.eq.s32.totalorder %s23, 1
      %p74 = por %p72, %p73
      %p75 = scmp.ne.s32.totalorder %s66, %s67
      %p76 = scmp.eq.s32.totalorder %s23, 0
      %p77 = por %p75, %p76
      %p78 = scmp.ne.s32.totalorder %s66, %s67
      %p79 = scmp.eq.s32.totalorder %s24, 1
      %p80 = por %p78, %p79
      %p82 = scmp.ne.s32.totalorder %s67, %s81
      %p83 = scmp.eq.s32.totalorder %s24, 0
      %p84 = por %p82, %p83
      %s86 = sadd.s32 %s85, 1
      %p89 = scmp.eq.s32.totalorder %s18, 1
      %p90 = scmp.ne.s32.totalorder %s85, %s87
      %p91 = scmp.eq.s32.totalorder %s18, 0
      %p92 = por %p90, %p91
      %p93 = scmp.ne.s32.totalorder %s85, %s87
      %p94 = scmp.eq.s32.totalorder %s23, 1
      %p95 = por %p93, %p94
      %p96 = scmp.ne.s32.totalorder %s87, %s88
      %p97 = scmp.eq.s32.totalorder %s23, 0
      %p98 = por %p96, %p97
      %p99 = scmp.ne.s32.totalorder %s87, %s88
      %p100 = scmp.eq.s32.totalorder %s24, 1
      %p101 = por %p99, %p100
      %p103 = scmp.ne.s32.totalorder %s88, %s102
      %p104 = scmp.eq.s32.totalorder %s24, 0
      %p105 = por %p103, %p104
      %s106 = ssub.s32 %s26, %s33
      %p107 = scmp.eq.s32.totalorder %s106, 0
      %s109 = sadd.s32 %s108, 1
      %s110 = scalar_select %p107, %s108, %s109
      %p113 = pneg %p107
      %p114 = scmp.eq.s32.totalorder %s18, 1
      %p115 = por %p113, %p114
      %p116 = scmp.ne.s32.totalorder %s108, %s111
      %p117 = scmp.eq.s32.totalorder %s18, 0
      %p118 = por %p116, %p117
      %p119 = scmp.ne.s32.totalorder %s108, %s111
      %p120 = scmp.eq.s32.totalorder %s23, 1
      %p121 = por %p119, %p120
      %p122 = scmp.ne.s32.totalorder %s111, %s112
      %p123 = scmp.eq.s32.totalorder %s23, 0
      %p124 = por %p122, %p123
      %p125 = scmp.ne.s32.totalorder %s111, %s112
      %p126 = scmp.eq.s32.totalorder %s24, 1
      %p127 = por %p125, %p126
      %p129 = scmp.ne.s32.totalorder %s112, %s128
      %p130 = scmp.eq.s32.totalorder %s24, 0
      %p131 = por %p129, %p130
      %s132 = ssub.s32 %s26, %s33
      %p133 = scmp.eq.s32.totalorder %s132, 0
      %s135 = sadd.s32 %s134, 1
      %s136 = scalar_select %p133, %s134, %s135
      %p139 = pneg %p133
      %p140 = scmp.eq.s32.totalorder %s18, 1
      %p141 = por %p139, %p140
      %p142 = scmp.ne.s32.totalorder %s134, %s137
      %p143 = scmp.eq.s32.totalorder %s18, 0
      %p144 = por %p142, %p143
      %p145 = scmp.ne.s32.totalorder %s134, %s137
      %p146 = scmp.eq.s32.totalorder %s23, 1
      %p147 = por %p145, %p146
      %p148 = scmp.ne.s32.totalorder %s137, %s138
      %p149 = scmp.eq.s32.totalorder %s23, 0
      %p150 = por %p148, %p149
      %p151 = scmp.ne.s32.totalorder %s137, %s138
      %p152 = scmp.eq.s32.totalorder %s24, 1
      %p153 = por %p151, %p152
      %p155 = scmp.ne.s32.totalorder %s138, %s154
      %p156 = scmp.eq.s32.totalorder %s24, 0
      %p157 = por %p155, %p156
      %s158 = ssub.s32 %s25, %s37
      %s159 = ssub.s32 %s26, %s33
      %s160 = sor.u32 %s158, %s159
      %p161 = scmp.eq.s32.totalorder %s160, 0
      %s163 = sadd.s32 %s162, 1
      %s164 = scalar_select %p161, %s162, %s163
      %p167 = pneg %p161
      %p168 = scmp.eq.s32.totalorder %s18, 1
      %p169 = por %p167, %p168
      %p170 = scmp.ne.s32.totalorder %s162, %s165
      %p171 = scmp.eq.s32.totalorder %s18, 0
      %p172 = por %p170, %p171
      %p173 = scmp.ne.s32.totalorder %s162, %s165
      %p174 = scmp.eq.s32.totalorder %s23, 1
      %p175 = por %p173, %p174
      %p176 = scmp.ne.s32.totalorder %s165, %s166
      %p177 = scmp.eq.s32.totalorder %s23, 0
      %p178 = por %p176, %p177
      %p179 = scmp.ne.s32.totalorder %s165, %s166
      %p180 = scmp.eq.s32.totalorder %s24, 1
      %p181 = por %p179, %p180
      %p183 = scmp.ne.s32.totalorder %s166, %s182
      %p184 = scmp.eq.s32.totalorder %s24, 0
      %p185 = por %p183, %p184
      %p186 = scmp.le.s32.totalorder 1, %s18
      %p187 = scmp.lt.s32.totalorder %s18, 3
      %p188 = pnand %p186, %p187
      %p189 = pneg %p188
      // Predicated region
      $region9: #{tpu_custom_call.1} parent=5 // pred_check
        _
      $region10: #{tpu_custom_call.1} parent=5 // pred_check_branch
        %191 = sbr.rel (%p188) target = $region12
      $region11: #{tpu_custom_call.1} parent=5 // pred_region
        %s192 = ssub.s32 %s18, 1
        // Predicated region
        $region13: #{tpu_custom_call.1} parent=11 // pred_check
          %p193 = pneg %p56
        $region14: #{tpu_custom_call.1} parent=11 // pred_check_branch
          %195 = sbr.rel (%p193) target = $region16
        $region15: #{tpu_custom_call.1} parent=11 // pred_region
          %s196 = smul.u32 2, %s27
          %s198 = ssub.s32 256, 256
          %199 = vsyncadd [#allocation6], %s198
          %s200 = smul.addr %s196, 2
          %s201 = smul.addr %s200, 64
          %s202 = scalar_lea.hbm %s1, %s201
          %s203 = sshll.u32 [#allocation5], 4
          %s204 = int_to_ptr.vmem [resolvable:$true] %s203
          %209 = dma.hbm_to_vmem [thread:$0]  %s202, 256, %s204, [#allocation6], 128, 128, 8
        $region16: #{tpu_custom_call.1} parent=11 // pred_fallthru
          _
        // Predicated region
        $region17: #{tpu_custom_call.1} parent=11 // pred_check
          %p210 = pneg %p77
        $region18: #{tpu_custom_call.1} parent=11 // pred_check_branch
          %212 = sbr.rel (%p210) target = $region20
        $region19: #{tpu_custom_call.1} parent=11 // pred_region
          %s214 = ssub.s32 4096, 4096
          %215 = vsyncadd [#allocation9], %s214
          %s216 = sshll.u32 [#allocation8], 4
          %s217 = int_to_ptr.vmem [resolvable:$true] %s216
          %222 = dma.hbm_to_vmem [thread:$0]  %s2, 4096, %s217, [#allocation9], 128, 128, 8
        $region20: #{tpu_custom_call.1} parent=11 // pred_fallthru
          _
        // Predicated region
        $region21: #{tpu_custom_call.1} parent=11 // pred_check
          %p223 = pneg %p98
        $region22: #{tpu_custom_call.1} parent=11 // pred_check_branch
          %225 = sbr.rel (%p223) target = $region24
        $region23: #{tpu_custom_call.1} parent=11 // pred_region
          _
        $region24: #{tpu_custom_call.1} parent=11 // pred_fallthru
          _
      $region12: #{tpu_custom_call.1} parent=5 // pred_fallthru
        _
      %p226 = scmp.lt.s32.totalorder %s18, 2
      // Predicated region
      $region25: #{tpu_custom_call.1} parent=5 // pred_check
        %p227 = pneg %p226
      $region26: #{tpu_custom_call.1} parent=5 // pred_check_branch
        %229 = sbr.rel (%p227) target = $region28
      $region27: #{tpu_custom_call.1} parent=5 // pred_region
        // Predicated region
        $region29: #{tpu_custom_call.1} parent=27 // pred_check
          %p230 = pneg %p118
        $region30: #{tpu_custom_call.1} parent=27 // pred_check_branch
          %232 = sbr.rel (%p230) target = $region32
        $region31: #{tpu_custom_call.1} parent=27 // pred_region
          %s233 = sand.u32 %s18, 1
          %s234 = scalar_lea.sflag [#allocation6], %s233
          %s235 = sand.u32 %s108, 1
          %s236 = smul.addr %s235, 128
          %s237 = scalar_lea.vmem [#allocation10], %s236
          %s239 = ssub.s32 2048, 2048
          %240 = vsyncadd %s234, %s239
          %s241 = smul.addr %s26, 64
          %s242 = scalar_lea.hbm %s4, %s241
          %s243 = sshll.u32 %s237, 4
          %s244 = int_to_ptr.vmem [resolvable:$true] %s243
          %249 = dma.hbm_to_vmem [thread:$0]  %s242, 2048, %s244, %s234, 128, 64, 4
        $region32: #{tpu_custom_call.1} parent=27 // pred_fallthru
          _
        // Predicated region
        $region33: #{tpu_custom_call.1} parent=27 // pred_check
          %p250 = pneg %p144
        $region34: #{tpu_custom_call.1} parent=27 // pred_check_branch
          %252 = sbr.rel (%p250) target = $region36
        $region35: #{tpu_custom_call.1} parent=27 // pred_region
          %p253 = scmp.lt.s32.totalorder %s26, 1
          %s254 = scalar_select %p253, %s26, 1
          %s255 = scalar_lea.vmem %s5, %s254
        $region36: #{tpu_custom_call.1} parent=27 // pred_fallthru
          _
      $region28: #{tpu_custom_call.1} parent=5 // pred_fallthru
        _
      %p256 = scmp.le.s32.totalorder 1, %s18
      %p257 = scmp.lt.s32.totalorder %s18, 3
      %p258 = pnand %p256, %p257
      %p259 = pneg %p258
      // Predicated region
      $region37: #{tpu_custom_call.1} parent=5 // pred_check
        _
      $region38: #{tpu_custom_call.1} parent=5 // pred_check_branch
        %261 = sbr.rel (%p258) target = $region40
      $region39: #{tpu_custom_call.1} parent=5 // pred_region
        %s262 = ssub.s32 %s18, 1
        // Predicated region
        $region41: #{tpu_custom_call.1} parent=39 // pred_check
          %p263 = pneg %p56
        $region42: #{tpu_custom_call.1} parent=39 // pred_check_branch
          %265 = sbr.rel (%p263) target = $region44
        $region43: #{tpu_custom_call.1} parent=39 // pred_region
          %266 = dma.done [#allocation6], 256
        $region44: #{tpu_custom_call.1} parent=39 // pred_fallthru
          _
        // Predicated region
        $region45: #{tpu_custom_call.1} parent=39 // pred_check
          %p267 = pneg %p77
        $region46: #{tpu_custom_call.1} parent=39 // pred_check_branch
          %269 = sbr.rel (%p267) target = $region48
        $region47: #{tpu_custom_call.1} parent=39 // pred_region
          %270 = dma.done [#allocation9], 4096
        $region48: #{tpu_custom_call.1} parent=39 // pred_fallthru
          _
        %s271 = sand.u32 %s23, 1
        %s272 = scalar_lea.sflag [#allocation6], %s271
        %s273 = sand.u32 %s111, 1
        %s274 = smul.addr %s273, 128
        %s275 = scalar_lea.vmem [#allocation10], %s274
        // Predicated region
        $region49: #{tpu_custom_call.1} parent=39 // pred_check
          %p276 = pneg %p124
        $region50: #{tpu_custom_call.1} parent=39 // pred_check_branch
          %278 = sbr.rel (%p276) target = $region52
        $region51: #{tpu_custom_call.1} parent=39 // pred_region
          %279 = dma.done %s272, 2048
        $region52: #{tpu_custom_call.1} parent=39 // pred_fallthru
          _
        %p280 = pneg %p56
        %p281 = pneg %p53
        %p282 = pneg %p77
        %p283 = pneg %p74
        %p284 = pneg %p98
        %p285 = pneg %p95
        %s286 = sand.u32 %s23, 1
        %s287 = scalar_lea.sflag [#allocation6], %s286
        %s288 = sand.u32 %s111, 1
        %s289 = smul.addr %s288, 128
        %s290 = scalar_lea.vmem [#allocation10], %s289
        %p291 = pneg %p124
        %p292 = pneg %p121
        %p293 = scmp.lt.s32.totalorder %s28, 1
        %s294 = scalar_select %p293, %s28, 1
        %s295 = scalar_lea.vmem %s5, %s294
        %p296 = pneg %p150
        %p297 = pneg %p147
        %p298 = pneg %p178
        %p299 = pneg %p175
        %s300 = sand.u32 %s165, 1
        %s301 = scalar_lea.sflag [#allocation7], %s300
        %s302 = sand.u32 %s165, 1
        %s303 = smul.addr %s302, 16
        %s304 = scalar_lea.vmem [#allocation11], %s303
        %s305 = smul.u32 2, %s27
        %p306 = scmp.lt.s32.totalorder %s28, 1
        %s307 = scalar_select %p306, %s28, 1
        %s308 = scalar_lea.vmem %s5, %s307
        %s309 = smul.u32 2, %s27
        %v311 = vld [vmem:[#allocation5] sm:$0xff]
        %v312 = vld [vmem:[#allocation5 + $0x8] sm:$0xff]
        %v313 = vld [vmem:[%s308] sm:$0x1]
        %v315 = vlaneseq
        %v316 = vshrl.u32 %v315, 7
        %v317 = vsub.s32 0, %v316
        %v318 = vrot.slane %v313, %v317
        %320 = vst [vmem:[#allocation2] sm:$0xff] %v318
        %321 = vst [vmem:[#allocation2 + $0x8] sm:$0xff] %v318
        %v322 = vld [vmem:[#allocation8] sm:$0xff]
        %v323 = vld [vmem:[#allocation8 + $0x8] sm:$0xff]
        %v324 = vld [vmem:[#allocation8 + $0x10] sm:$0xff]
        %v325 = vld [vmem:[#allocation8 + $0x18] sm:$0xff]
        %v326 = vld [vmem:[#allocation8 + $0x20] sm:$0xff]
        %v327 = vld [vmem:[#allocation8 + $0x28] sm:$0xff]
        %v328 = vld [vmem:[#allocation8 + $0x30] sm:$0xff]
        %v329 = vld [vmem:[#allocation8 + $0x38] sm:$0xff]
        %v330 = vld [vmem:[#allocation8 + $0x40] sm:$0xff]
        %v331 = vld [vmem:[#allocation8 + $0x48] sm:$0xff]
        %v332 = vld [vmem:[#allocation8 + $0x50] sm:$0xff]
        %v333 = vld [vmem:[#allocation8 + $0x58] sm:$0xff]
        %v334 = vld [vmem:[#allocation8 + $0x60] sm:$0xff]
        %v335 = vld [vmem:[#allocation8 + $0x68] sm:$0xff]
        %v336 = vld [vmem:[#allocation8 + $0x70] sm:$0xff]
        %v337 = vld [vmem:[#allocation8 + $0x78] sm:$0xff]
        %v338 = vld [vmem:[#allocation8 + $0x80] sm:$0xff]
        %v339 = vld [vmem:[#allocation8 + $0x88] sm:$0xff]
        %v340 = vld [vmem:[#allocation8 + $0x90] sm:$0xff]
        %v341 = vld [vmem:[#allocation8 + $0x98] sm:$0xff]
        %v342 = vld [vmem:[#allocation8 + $0xa0] sm:$0xff]
        %v343 = vld [vmem:[#allocation8 + $0xa8] sm:$0xff]
        %v344 = vld [vmem:[#allocation8 + $0xb0] sm:$0xff]
        %v345 = vld [vmem:[#allocation8 + $0xb8] sm:$0xff]
        %v346 = vld [vmem:[#allocation8 + $0xc0] sm:$0xff]
        %v347 = vld [vmem:[#allocation8 + $0xc8] sm:$0xff]
        %v348 = vld [vmem:[#allocation8 + $0xd0] sm:$0xff]
        %v349 = vld [vmem:[#allocation8 + $0xd8] sm:$0xff]
        %v350 = vld [vmem:[#allocation8 + $0xe0] sm:$0xff]
        %v351 = vld [vmem:[#allocation8 + $0xe8] sm:$0xff]
        %v352 = vld [vmem:[#allocation8 + $0xf0] sm:$0xff]
        %v353 = vld [vmem:[#allocation8 + $0xf8] sm:$0xff]
        %v354 = vld [vmem:[%s3] sm:$0x3]
        %v356 = vlaneseq
        %v357 = vshrl.u32 %v356, 7
        %v358 = vsub.s32 0, %v357
        %v359 = vrot.slane %v354, %v358
        %v360 = vlaneseq
        %v361 = vshrl.u32 %v360, 7
        %v362 = vsub.s32 1, %v361
        %v363 = vrot.slane %v354, %v362
        %v368 = vunpack.c.l.b16 %v311
        %v369 = vunpack.c.h.b16 %v311
        %v370 = vunpack.c.l.b16 %v312
        %v371 = vunpack.c.h.b16 %v312
        %v372 = vpack.c.b16 %v370, %v368
        %v373 = vpack.c.b16 %v371, %v369
        %v408 = vunpack.c.l.b16 %v322
        %v409 = vunpack.c.h.b16 %v322
        %v410 = vunpack.c.l.b16 %v323
        %v411 = vunpack.c.h.b16 %v323
        %v412 = vunpack.c.l.b16 %v324
        %v413 = vunpack.c.h.b16 %v324
        %v414 = vunpack.c.l.b16 %v325
        %v415 = vunpack.c.h.b16 %v325
        %v416 = vunpack.c.l.b16 %v326
        %v417 = vunpack.c.h.b16 %v326
        %v418 = vunpack.c.l.b16 %v327
        %v419 = vunpack.c.h.b16 %v327
        %v420 = vunpack.c.l.b16 %v328
        %v421 = vunpack.c.h.b16 %v328
        %v422 = vunpack.c.l.b16 %v329
        %v423 = vunpack.c.h.b16 %v329
        %v424 = vunpack.c.l.b16 %v330
        %v425 = vunpack.c.h.b16 %v330
        %v426 = vunpack.c.l.b16 %v331
        %v427 = vunpack.c.h.b16 %v331
        %v428 = vunpack.c.l.b16 %v332
        %v429 = vunpack.c.h.b16 %v332
        %v430 = vunpack.c.l.b16 %v333
        %v431 = vunpack.c.h.b16 %v333
        %v432 = vunpack.c.l.b16 %v334
        %v433 = vunpack.c.h.b16 %v334
        %v434 = vunpack.c.l.b16 %v335
        %v435 = vunpack.c.h.b16 %v335
        %v436 = vunpack.c.l.b16 %v336
        %v437 = vunpack.c.h.b16 %v336
        %v438 = vunpack.c.l.b16 %v337
        %v439 = vunpack.c.h.b16 %v337
        %v440 = vunpack.c.l.b16 %v338
        %v441 = vunpack.c.h.b16 %v338
        %v442 = vunpack.c.l.b16 %v339
        %v443 = vunpack.c.h.b16 %v339
        %v444 = vunpack.c.l.b16 %v340
        %v445 = vunpack.c.h.b16 %v340
        %v446 = vunpack.c.l.b16 %v341
        %v447 = vunpack.c.h.b16 %v341
        %v448 = vunpack.c.l.b16 %v342
        %v449 = vunpack.c.h.b16 %v342
        %v450 = vunpack.c.l.b16 %v343
        %v451 = vunpack.c.h.b16 %v343
        %v452 = vunpack.c.l.b16 %v344
        %v453 = vunpack.c.h.b16 %v344
        %v454 = vunpack.c.l.b16 %v345
        %v455 = vunpack.c.h.b16 %v345
        %v456 = vunpack.c.l.b16 %v346
        %v457 = vunpack.c.h.b16 %v346
        %v458 = vunpack.c.l.b16 %v347
        %v459 = vunpack.c.h.b16 %v347
        %v460 = vunpack.c.l.b16 %v348
        %v461 = vunpack.c.h.b16 %v348
        %v462 = vunpack.c.l.b16 %v349
        %v463 = vunpack.c.h.b16 %v349
        %v464 = vunpack.c.l.b16 %v350
        %v465 = vunpack.c.h.b16 %v350
        %v466 = vunpack.c.l.b16 %v351
        %v467 = vunpack.c.h.b16 %v351
        %v468 = vunpack.c.l.b16 %v352
        %v469 = vunpack.c.h.b16 %v352
        %v470 = vunpack.c.l.b16 %v353
        %v471 = vunpack.c.h.b16 %v353
        %v472 = vpack.c.b16 %v410, %v408
        %v473 = vpack.c.b16 %v411, %v409
        %v474 = vpack.c.b16 %v414, %v412
        %v475 = vpack.c.b16 %v415, %v413
        %v476 = vpack.c.b16 %v418, %v416
        %v477 = vpack.c.b16 %v419, %v417
        %v478 = vpack.c.b16 %v422, %v420
        %v479 = vpack.c.b16 %v423, %v421
        %v480 = vpack.c.b16 %v426, %v424
        %v481 = vpack.c.b16 %v427, %v425
        %v482 = vpack.c.b16 %v430, %v428
        %v483 = vpack.c.b16 %v431, %v429
        %v484 = vpack.c.b16 %v434, %v432
        %v485 = vpack.c.b16 %v435, %v433
        %v486 = vpack.c.b16 %v438, %v436
        %v487 = vpack.c.b16 %v439, %v437
        %v488 = vpack.c.b16 %v442, %v440
        %v489 = vpack.c.b16 %v443, %v441
        %v490 = vpack.c.b16 %v446, %v444
        %v491 = vpack.c.b16 %v447, %v445
        %v492 = vpack.c.b16 %v450, %v448
        %v493 = vpack.c.b16 %v451, %v449
        %v494 = vpack.c.b16 %v454, %v452
        %v495 = vpack.c.b16 %v455, %v453
        %v496 = vpack.c.b16 %v458, %v456
        %v497 = vpack.c.b16 %v459, %v457
        %v498 = vpack.c.b16 %v462, %v460
        %v499 = vpack.c.b16 %v463, %v461
        %v500 = vpack.c.b16 %v466, %v464
        %v501 = vpack.c.b16 %v467, %v465
        %v502 = vpack.c.b16 %v470, %v468
        %v503 = vpack.c.b16 %v471, %v469
        %536 = vmatprep.subr.bf16.mxu0 %v473
        %537 = vmatpush1.bf16.msra.mxu0 %v472
        %538 = vmatprep.subr.bf16.mxu0 %v475
        %539 = vmatpush1.bf16.msra.mxu0 %v474
        %540 = vmatprep.subr.bf16.mxu0 %v477
        %541 = vmatpush1.bf16.msra.mxu0 %v476
        %542 = vmatprep.subr.bf16.mxu0 %v479
        %543 = vmatpush1.bf16.msra.mxu0 %v478
        %544 = vmatprep.subr.bf16.mxu0 %v481
        %545 = vmatpush1.bf16.msra.mxu0 %v480
        %546 = vmatprep.subr.bf16.mxu0 %v483
        %547 = vmatpush1.bf16.msra.mxu0 %v482
        %548 = vmatprep.subr.bf16.mxu0 %v485
        %549 = vmatpush1.bf16.msra.mxu0 %v484
        %550 = vmatprep.subr.bf16.mxu0 %v487
        %551 = vmatpush1.bf16.msra.mxu0 %v486
        %552 = vmatprep.subr.bf16.mxu0 %v489
        %553 = vmatpush1.bf16.msra.mxu0 %v488
        %554 = vmatprep.subr.bf16.mxu0 %v491
        %555 = vmatpush1.bf16.msra.mxu0 %v490
        %556 = vmatprep.subr.bf16.mxu0 %v493
        %557 = vmatpush1.bf16.msra.mxu0 %v492
        %558 = vmatprep.subr.bf16.mxu0 %v495
        %559 = vmatpush1.bf16.msra.mxu0 %v494
        %560 = vmatprep.subr.bf16.mxu0 %v497
        %561 = vmatpush1.bf16.msra.mxu0 %v496
        %562 = vmatprep.subr.bf16.mxu0 %v499
        %563 = vmatpush1.bf16.msra.mxu0 %v498
        %564 = vmatprep.subr.bf16.mxu0 %v501
        %565 = vmatpush1.bf16.msra.mxu0 %v500
        %566 = vmatprep.subr.bf16.mxu0 %v503
        %567 = vmatpush1.bf16.msra.mxu0 %v502
        %568 = vmatprep.mubr.bf16.mxu0 %v373
        %569 = vmatmul.mubr.bf16.gmra.mrb[0].mxu0 %v372
        %v570 = vpop.f32.mrb[0].mxu0
        %v571 = vadd.f32 %v359, %v570
        %v572 = vpop.f32.mrb[0].mxu0
        %v573 = vadd.f32 %v363, %v572
        %v574 = vpop.f32.mrb[0].mxu0
        %v575 = vadd.f32 %v359, %v574
        %v576 = vpop.f32.mrb[0].mxu0
        %v577 = vadd.f32 %v363, %v576
        %578 = vdwg.mxu0
        %v579 = vmax.f32 %v571, 0.0
        %v580 = vmax.f32 %v573, 0.0
        %v581 = vmax.f32 %v575, 0.0
        %v582 = vmax.f32 %v577, 0.0
        %v583 = vld [vmem:[#allocation2] sm:$0xff]
        %v584 = vld [vmem:[#allocation2 + $0x8] sm:$0xff]
        %v585 = vpack.c.bf16 %v581, %v579
        %v586 = vpack.c.bf16 %v582, %v580
        %v587 = vld [vmem:[%s275] sm:$0xf]
        %v588 = vld [vmem:[%s275 + $0x4] sm:$0xf]
        %v589 = vld [vmem:[%s275 + $0x8] sm:$0xf]
        %v590 = vld [vmem:[%s275 + $0xc] sm:$0xf]
        %v591 = vld [vmem:[%s275 + $0x10] sm:$0xf]
        %v592 = vld [vmem:[%s275 + $0x14] sm:$0xf]
        %v593 = vld [vmem:[%s275 + $0x18] sm:$0xf]
        %v594 = vld [vmem:[%s275 + $0x1c] sm:$0xf]
        %v595 = vld [vmem:[%s275 + $0x20] sm:$0xf]
        %v596 = vld [vmem:[%s275 + $0x24] sm:$0xf]
        %v597 = vld [vmem:[%s275 + $0x28] sm:$0xf]
        %v598 = vld [vmem:[%s275 + $0x2c] sm:$0xf]
        %v599 = vld [vmem:[%s275 + $0x30] sm:$0xf]
        %v600 = vld [vmem:[%s275 + $0x34] sm:$0xf]
        %v601 = vld [vmem:[%s275 + $0x38] sm:$0xf]
        %v602 = vld [vmem:[%s275 + $0x3c] sm:$0xf]
        %v603 = vld [vmem:[%s275 + $0x40] sm:$0xf]
        %v604 = vld [vmem:[%s275 + $0x44] sm:$0xf]
        %v605 = vld [vmem:[%s275 + $0x48] sm:$0xf]
        %v606 = vld [vmem:[%s275 + $0x4c] sm:$0xf]
        %v607 = vld [vmem:[%s275 + $0x50] sm:$0xf]
        %v608 = vld [vmem:[%s275 + $0x54] sm:$0xf]
        %v609 = vld [vmem:[%s275 + $0x58] sm:$0xf]
        %v610 = vld [vmem:[%s275 + $0x5c] sm:$0xf]
        %v611 = vld [vmem:[%s275 + $0x60] sm:$0xf]
        %v612 = vld [vmem:[%s275 + $0x64] sm:$0xf]
        %v613 = vld [vmem:[%s275 + $0x68] sm:$0xf]
        %v614 = vld [vmem:[%s275 + $0x6c] sm:$0xf]
        %v615 = vld [vmem:[%s275 + $0x70] sm:$0xf]
        %v616 = vld [vmem:[%s275 + $0x74] sm:$0xf]
        %v617 = vld [vmem:[%s275 + $0x78] sm:$0xf]
        %v618 = vld [vmem:[%s275 + $0x7c] sm:$0xf]
        %v651 = vunpack.c.l.b16 %v587
        %v652 = vunpack.c.l.b16 %v588
        %v653 = vunpack.c.l.b16 %v589
        %v654 = vunpack.c.l.b16 %v590
        %v655 = vunpack.c.l.b16 %v591
        %v656 = vunpack.c.l.b16 %v592
        %v657 = vunpack.c.l.b16 %v593
        %v658 = vunpack.c.l.b16 %v594
        %v659 = vunpack.c.l.b16 %v595
        %v660 = vunpack.c.l.b16 %v596
        %v661 = vunpack.c.l.b16 %v597
        %v662 = vunpack.c.l.b16 %v598
        %v663 = vunpack.c.l.b16 %v599
        %v664 = vunpack.c.l.b16 %v600
        %v665 = vunpack.c.l.b16 %v601
        %v666 = vunpack.c.l.b16 %v602
        %v667 = vunpack.c.l.b16 %v603
        %v668 = vunpack.c.l.b16 %v604
        %v669 = vunpack.c.l.b16 %v605
        %v670 = vunpack.c.l.b16 %v606
        %v671 = vunpack.c.l.b16 %v607
        %v672 = vunpack.c.l.b16 %v608
        %v673 = vunpack.c.l.b16 %v609
        %v674 = vunpack.c.l.b16 %v610
        %v675 = vunpack.c.l.b16 %v611
        %v676 = vunpack.c.l.b16 %v612
        %v677 = vunpack.c.l.b16 %v613
        %v678 = vunpack.c.l.b16 %v614
        %v679 = vunpack.c.l.b16 %v615
        %v680 = vunpack.c.l.b16 %v616
        %v681 = vunpack.c.l.b16 %v617
        %v682 = vunpack.c.l.b16 %v618
        %v683 = vpack.c.b16 %v652, %v651
        %v684 = vpack.c.b16 %v654, %v653
        %v685 = vpack.c.b16 %v656, %v655
        %v686 = vpack.c.b16 %v658, %v657
        %v687 = vpack.c.b16 %v660, %v659
        %v688 = vpack.c.b16 %v662, %v661
        %v689 = vpack.c.b16 %v664, %v663
        %v690 = vpack.c.b16 %v666, %v665
        %v691 = vpack.c.b16 %v668, %v667
        %v692 = vpack.c.b16 %v670, %v669
        %v693 = vpack.c.b16 %v672, %v671
        %v694 = vpack.c.b16 %v674, %v673
        %v695 = vpack.c.b16 %v676, %v675
        %v696 = vpack.c.b16 %v678, %v677
        %v697 = vpack.c.b16 %v680, %v679
        %v698 = vpack.c.b16 %v682, %v681
        %715 = vmatprep.subr.bf16.mxu0 0
        %716 = vmatpush1.bf16.msra.mxu0 %v683
        %717 = vmatprep.subr.bf16.mxu0 0
        %718 = vmatpush1.bf16.msra.mxu0 %v684
        %719 = vmatprep.subr.bf16.mxu0 0
        %720 = vmatpush1.bf16.msra.mxu0 %v685
        %721 = vmatprep.subr.bf16.mxu0 0
        %722 = vmatpush1.bf16.msra.mxu0 %v686
        %723 = vmatprep.subr.bf16.mxu0 0
        %724 = vmatpush1.bf16.msra.mxu0 %v687
        %725 = vmatprep.subr.bf16.mxu0 0
        %726 = vmatpush1.bf16.msra.mxu0 %v688
        %727 = vmatprep.subr.bf16.mxu0 0
        %728 = vmatpush1.bf16.msra.mxu0 %v689
        %729 = vmatprep.subr.bf16.mxu0 0
        %730 = vmatpush1.bf16.msra.mxu0 %v690
        %731 = vmatprep.subr.bf16.mxu0 0
        %732 = vmatpush1.bf16.msra.mxu0 %v691
        %733 = vmatprep.subr.bf16.mxu0 0
        %734 = vmatpush1.bf16.msra.mxu0 %v692
        %735 = vmatprep.subr.bf16.mxu0 0
        %736 = vmatpush1.bf16.msra.mxu0 %v693
        %737 = vmatprep.subr.bf16.mxu0 0
        %738 = vmatpush1.bf16.msra.mxu0 %v694
        %739 = vmatprep.subr.bf16.mxu0 0
        %740 = vmatpush1.bf16.msra.mxu0 %v695
        %741 = vmatprep.subr.bf16.mxu0 0
        %742 = vmatpush1.bf16.msra.mxu0 %v696
        %743 = vmatprep.subr.bf16.mxu0 0
        %744 = vmatpush1.bf16.msra.mxu0 %v697
        %745 = vmatprep.subr.bf16.mxu0 0
        %746 = vmatpush1.bf16.msra.mxu0 %v698
        %747 = vmatprep.mubr.bf16.mxu0 %v586
        %748 = vmatmul.mubr.bf16.gmra.mrb[0].mxu0 %v585
        %v749 = vpop.f32.mrb[0].mxu0
        %v750 = vadd.f32 0.0, %v749
        %v751 = vpop.f32.mrb[0].mxu0
        %v752 = vpop.f32.mrb[0].mxu0
        %v753 = vadd.f32 0.0, %v752
        %v754 = vpop.f32.mrb[0].mxu0
        %755 = vdwg.mxu0
        %v756 = vadd.f32 %v583, %v750
        %v757 = vadd.f32 %v584, %v753
        %758 = vst [vmem:[#allocation2] sm:$0xff] %v756
        %759 = vst [vmem:[#allocation2 + $0x8] sm:$0xff] %v757
        %v760 = vld [vmem:[#allocation2] sm:$0xff]
        %v761 = vld [vmem:[#allocation2 + $0x8] sm:$0xff]
        %762 = vst [vmem:[%s304] sm:$0xff] %v760
        %763 = vst [vmem:[%s304 + $0x8] sm:$0xff] %v761
        %s764 = sand.u32 %s165, 1
        %s765 = scalar_lea.sflag [#allocation7], %s764
        %s766 = sand.u32 %s165, 1
        %s767 = smul.addr %s766, 16
        %s768 = scalar_lea.vmem [#allocation11], %s767
        // Predicated region
        $region53: #{tpu_custom_call.1} parent=39 // pred_check
          %p769 = pneg %p175
        $region54: #{tpu_custom_call.1} parent=39 // pred_check_branch
          %771 = sbr.rel (%p769) target = $region56
        $region55: #{tpu_custom_call.1} parent=39 // pred_region
          %s772 = smul.u32 2, %s27
          %s774 = ssub.s32 256, 256
          %775 = vsyncadd %s765, %s774
          %s776 = smul.addr %s772, 2
          %s777 = sadd.s32 %s28, %s776
          %s778 = smul.addr %s777, 128
          %s779 = scalar_lea.hbm %s6, %s778
          %s780 = sshll.u32 %s768, 4
          %s781 = int_to_ptr.vmem [resolvable:$true] %s780
          %786 = dma.vmem_to_hbm [thread:$0]  %s781, 256, %s779, %s765, 128, 256, 8
        $region56: #{tpu_custom_call.1} parent=39 // pred_fallthru
          _
      $region40: #{tpu_custom_call.1} parent=5 // pred_fallthru
        _
      %p787 = scmp.le.s32.totalorder 2, %s18
      // Predicated region
      $region57: #{tpu_custom_call.1} parent=5 // pred_check
        %p788 = pneg %p787
      $region58: #{tpu_custom_call.1} parent=5 // pred_check_branch
        %790 = sbr.rel (%p788) target = $region60
      $region59: #{tpu_custom_call.1} parent=5 // pred_region
        %s791 = ssub.s32 %s18, 2
        // Predicated region
        $region61: #{tpu_custom_call.1} parent=59 // pred_check
          %p792 = pneg %p181
        $region62: #{tpu_custom_call.1} parent=59 // pred_check_branch
          %794 = sbr.rel (%p792) target = $region64
        $region63: #{tpu_custom_call.1} parent=59 // pred_region
          %s795 = sand.u32 %s166, 1
          %s796 = scalar_lea.sflag [#allocation7], %s795
          %s797 = sand.u32 %s166, 1
          %s798 = smul.addr %s797, 16
          %s799 = scalar_lea.vmem [#allocation11], %s798
          %800 = dma.done %s796, 256
        $region64: #{tpu_custom_call.1} parent=59 // pred_fallthru
          _
      $region60: #{tpu_custom_call.1} parent=5 // pred_fallthru
        _
    $region6: #{tpu_custom_call.1} parent=1 // loop_footer
      %s22 = sadd.s32 1, %s18
    $region7: #{tpu_custom_call.1} parent=1 // loop_footer_branch
      %17 = sbr.rel target = $region3
    $region8: #{tpu_custom_call.1} parent=1 // loop_exit
      _
    %801 = vsyncpa [#allocation6], 1
    %s802 = scalar_lea.sflag [#allocation6], 1
    %803 = vsyncpa %s802, 1
    %804 = vsyncpa [#allocation9], 1
    %805 = vsyncpa [#allocation7], 1
    %s806 = scalar_lea.sflag [#allocation7], 1
    %807 = vsyncpa %s806, 1

</llo_original>
